<compile_context>
chip_gen: v6e
topology: v6e:2x2x1
jax: 0.10.0
libtpu: 0.0.40
codegen_flags: <defaults>
</compile_context>

<pallas_src>
import functools

import jax
import jax.numpy as jnp
from jax import lax
from jax.experimental import pallas as pl
from jax.experimental.pallas import tpu as pltpu

_LANES = 128
_SUB_CHUNKS = 4                          # 128-lane groups folded per inner step
_BLOCK_BUDGET_BYTES = 20 * 1024 * 1024   # pipelined blocks + accumulator budget
_VMEM_LIMIT_BYTES = 32 * 1024 * 1024     # explicit scoped-VMEM limit (v5e/v6e/v7x safe)


def _round_up(x, m):
    return (x + m - 1) // m * m


def _choose_tiles(B, C, HW, itemsize):
    """Pick tiling from the real (layout-padded) VMEM footprint; never pad HBM."""
    c_pad = _round_up(C, max(8, 32 // itemsize))        # sublane-padded channels
    cm1_pad = _round_up(C - 1, 8)
    chunks = pl.cdiv(HW, _LANES)                        # spatial 128-lane chunks
    in_chunk = c_pad * _LANES * itemsize                # real bytes / (row, chunk)
    acc_row = cm1_pad * min(chunks, _SUB_CHUNKS) * _LANES * 4
    out_row = 2 * _LANES * 4                            # double-buffered out block row

    # --- batch tiling: >= 2 batch tiles (megacore) whenever B >= 16 ---------
    if B >= 16:
        per_row = 2 * in_chunk * chunks + acc_row + out_row   # whole HW per row, x2 buf
        rows = max(1, _BLOCK_BUDGET_BYTES // per_row)
        b_tile = max(8, (min(rows, B // 2) // 8) * 8)   # multiple of 8, <= B//2
    else:
        b_tile = B                                      # block dim == full array dim
    n_b = pl.cdiv(B, b_tile)

    # --- parallel split of the reduction when the batch can't provide >=2 tiles
    n_par = 2 if (n_b == 1 and chunks >= 2) else 1

    # --- spatial tiling: balanced tiles close to the byte budget ------------
    spatial_budget = max(_BLOCK_BUDGET_BYTES - b_tile * (acc_row + out_row),
                         2 * b_tile * in_chunk)
    cpb = max(1, spatial_budget // (2 * b_tile * in_chunk))   # chunks per block
    n_hw = max(n_par, pl.cdiv(chunks, cpb))
    cpb = pl.cdiv(chunks, n_hw)                               # balanced split
    if cpb > _SUB_CHUNKS:
        cpb = _round_up(cpb, _SUB_CHUNKS)
    hw_tile = cpb * _LANES
    n_hw_total = pl.cdiv(chunks, cpb)          # hw tiles actually covering the array
    n_hw_group = pl.cdiv(n_hw_total, n_par)    # reduction-axis grid extent
    sub_lanes = min(hw_tile, _SUB_CHUNKS * _LANES)
    return b_tile, n_b, hw_tile, n_hw_total, n_hw_group, n_par, sub_lanes


def _cw_pool_kernel(x_ref, o_ref, acc_ref, *, hw, sub_lanes, n_hw_group, ragged):
    # x_ref  : (b_tile, C, hw_tile)        input block
    # o_ref  : (1, b_tile, C-1) f32        partial output (written once per tile)
    # acc_ref: (b_tile, C-1, sub_lanes) f32 lane-wide accumulator (persists over k)
    b_tile, c, hw_tile = x_ref.shape
    cm1 = c - 1
    n_inner = hw_tile // sub_lanes
    k = pl.program_id(2)

    @pl.when(k == 0)
    def _():
        acc_ref[...] = jnp.zeros_like(acc_ref)

    if ragged:
        # Logical spatial offset of this block's first lane.  It may exceed HW
        # for the partial / clamped last tile -- those lanes are masked below
        # (on the product, so softplus(garbage) can never reach the accumulator).
        block_base = (pl.program_id(0) * n_hw_group + k) * hw_tile
        lane_idx = lax.broadcasted_iota(jnp.int32, (1, 1, sub_lanes), 2)

    def step(off):
        xb = x_ref[:, :, pl.ds(off, sub_lanes)].astype(jnp.float32)
        logits = xb[:, cm1:c, :]                       # (b_tile, 1, sub_lanes)
        # torch.nn.Softplus (beta=1, threshold=20); exp argument clamped.
        w = jnp.where(logits > 20.0, logits,
                      jnp.log1p(jnp.exp(jnp.minimum(logits, 20.0))))
        prod = xb[:, :cm1, :] * w                      # (b_tile, C-1, sub_lanes)
        if ragged:
            valid = (block_base + off + lane_idx) < hw
            prod = jnp.where(valid, prod, 0.0)
        acc_ref[...] += prod                           # 4 independent lane groups

    if n_inner == 1:
        step(0)
    else:
        def body(j, carry):
            step(pl.multiple_of(j * sub_lanes, 128))
            return carry
        lax.fori_loop(0, n_inner, body, 0,
                      unroll=True if n_inner <= 8 else 2)

    # Single cross-lane (XLU) reduce + tiny store, once per (par, batch) tile.
    @pl.when(k == pl.num_programs(2) - 1)
    def _():
        res = jnp.sum(acc_ref[...], axis=-1)           # (b_tile, C-1)
        o_ref[...] = res[None].astype(o_ref.dtype)


def confidence_weighted_avg_pool2d(x):
    """x: (B, C, H, W) -> (B, C-1), confidence-weighted spatial sum."""
    B, C, H, W = x.shape
    assert C >= 2, "need at least one feature channel plus the confidence channel"
    Cm1 = C - 1
    HW = H * W
    itemsize = jnp.dtype(x.dtype).itemsize

    xr = x.reshape(B, C, HW)   # layout plumbing only -- never padded / copied

    (b_tile, n_b, hw_tile, n_hw_total,
     n_hw_group, n_par, sub_lanes) = _choose_tiles(B, C, HW, itemsize)

    # Any logical overhang (partial last tile or clamped duplicate tile) needs
    # the in-kernel lane mask.
    ragged = (n_par * n_hw_group * hw_tile != HW)

    kernel = functools.partial(
        _cw_pool_kernel, hw=HW, sub_lanes=sub_lanes,
        n_hw_group=n_hw_group, ragged=ragged)

    def x_map(p, b, k):
        # Clamp to the last real block; fully out-of-range logical tiles are
        # completely masked in the kernel, so re-reading a valid block is exact.
        return (b, 0, jnp.minimum(p * n_hw_group + k, n_hw_total - 1))

    out = pl.pallas_call(
        kernel,
        out_shape=jax.ShapeDtypeStruct((n_par, B, Cm1), jnp.float32),
        grid=(n_par, n_b, n_hw_group),                  # reduction axis last
        in_specs=[pl.BlockSpec((b_tile, C, hw_tile), x_map)],
        out_specs=pl.BlockSpec((1, b_tile, Cm1), lambda p, b, k: (p, b, 0)),
        scratch_shapes=[pltpu.VMEM((b_tile, Cm1, sub_lanes), jnp.float32)],
        compiler_params=pltpu.CompilerParams(
            dimension_semantics=("parallel", "parallel", "arbitrary"),
            vmem_limit_bytes=_VMEM_LIMIT_BYTES,
        ),
    )(xr)

    # Combine the (tiny) parallel partial sums and cast back to the input dtype.
    return out.sum(axis=0).astype(x.dtype)


def _reference(x):
    weight = jax.nn.softplus(x[:, -1:, :, :])
    return jnp.sum(x[:, :-1, :, :] * weight, axis=(-2, -1))


if __name__ == "__main__":
    key = jax.random.PRNGKey(0)

    # Primary small test (NCHW usage as in the PyTorch module).
    B, C, H, W = 2, 4, 16, 16
    x = jax.random.normal(key, (B, C, H, W), dtype=jnp.float32)
    y = jax.block_until_ready(confidence_weighted_avg_pool2d(x))
    y_ref = _reference(x)
    assert y.shape == (B, C - 1), y.shape
    assert jnp.allclose(y, y_ref, atol=1e-4, rtol=1e-4)

    # Ragged spatial extent (H*W not a multiple of 128) -> in-kernel lane mask.
    x2 = jax.random.normal(jax.random.PRNGKey(1), (3, 4, 10, 10), jnp.float32)
    y2 = jax.block_until_ready(confidence_weighted_avg_pool2d(x2))
    assert jnp.allclose(y2, _reference(x2), atol=1e-4, rtol=1e-4)

    # Multi-chunk spatial reduction split across the two parallel halves.
    x3 = jax.random.normal(jax.random.PRNGKey(2), (2, 5, 96, 96), jnp.float32)
    y3 = jax.block_until_ready(confidence_weighted_avg_pool2d(x3))
    assert jnp.allclose(y3, _reference(x3), atol=1e-3, rtol=1e-4)

    # Batch-tiled path (B >= 16, ragged batch tail) + ragged spatial tail.
    x4 = jax.random.normal(jax.random.PRNGKey(3), (17, 4, 12, 12), jnp.float32)
    y4 = jax.block_until_ready(confidence_weighted_avg_pool2d(x4))
    assert jnp.allclose(y4, _reference(x4), atol=1e-3, rtol=1e-4)

    print("KERNEL_OK")
</pallas_src>

<mosaic_0001>
module attributes {stable_mosaic.version = 11 : i64} {
  func.func @_cw_pool_kernel(%arg0: i32, %arg1: i32, %arg2: i32, %arg3: memref<2x4x128xf32, #tpu.memory_space<vmem>>, %arg4: memref<1x2x3xf32, #tpu.memory_space<vmem>>, %arg5: memref<2x3x128xf32, #tpu.memory_space<vmem>>) attributes {dimension_semantics = [#tpu.dimension_semantics<parallel>, #tpu.dimension_semantics<parallel>, #tpu.dimension_semantics<arbitrary>], iteration_bounds = array<i64: 2, 1, 1>, scalar_prefetch = 0 : i64, scratch_operands = 1 : i64, tpu.core_type = #tpu.core_type<tc>, window_params = [{transform_indices = @transform_0, window_bounds = array<i64: 2, 4, 128>}, {transform_indices = @transform_1, window_bounds = array<i64: 1, 2, 3>}]} {
    %c0_i32 = arith.constant 0 : i32
    %0 = arith.cmpi eq, %arg2, %c0_i32 : i32
    %1 = arith.extui %0 : i1 to i32
    %c0_i32_0 = arith.constant 0 : i32
    %2 = arith.cmpi ne, %1, %c0_i32_0 : i32
    scf.if %2 {
      %cst_12 = arith.constant 0.000000e+00 : f32
      %21 = vector.broadcast %cst_12 : f32 to vector<2x3x128xf32>
      %c0_13 = arith.constant 0 : index
      %c0_14 = arith.constant 0 : index
      %c0_15 = arith.constant 0 : index
      %22 = vector.load %arg5[%c0_13, %c0_14, %c0_15] : memref<2x3x128xf32, #tpu.memory_space<vmem>>, vector<2x3x128xf32>
      tpu.vector_store %arg5[%c0_13, %c0_14, %c0_15], %21 {strides = array<i32>} : memref<2x3x128xf32, #tpu.memory_space<vmem>>, vector<2x3x128xf32>,
    } else {
    }
    %c0 = arith.constant 0 : index
    %c0_1 = arith.constant 0 : index
    %c0_2 = arith.constant 0 : index
    %3 = vector.load %arg3[%c0, %c0_1, %c0_2] : memref<2x4x128xf32, #tpu.memory_space<vmem>>, vector<2x4x128xf32>
    %4 = vector.extract_strided_slice %3 {offsets = [0, 3, 0], sizes = [2, 1, 128], strides = [1, 1, 1]} : vector<2x4x128xf32> to vector<2x1x128xf32>
    %cst = arith.constant 2.000000e+01 : f32
    %5 = vector.broadcast %cst : f32 to vector<2x1x128xf32>
    %6 = arith.cmpf ogt, %4, %5 : vector<2x1x128xf32>
    %cst_3 = arith.constant 2.000000e+01 : f32
    %7 = vector.broadcast %cst_3 : f32 to vector<2x1x128xf32>
    %8 = arith.minimumf %4, %7 : vector<2x1x128xf32>
    %9 = math.exp %8 : vector<2x1x128xf32>
    %10 = math.log1p %9 : vector<2x1x128xf32>
    %11 = arith.select %6, %4, %10 : vector<2x1x128xi1>, vector<2x1x128xf32>
    %12 = vector.extract_strided_slice %3 {offsets = [0, 0, 0], sizes = [2, 3, 128], strides = [1, 1, 1]} : vector<2x4x128xf32> to vector<2x3x128xf32>
    %13 = vector.broadcast %11 : vector<2x1x128xf32> to vector<2x3x128xf32>
    %14 = arith.mulf %12, %13 : vector<2x3x128xf32>
    %c0_4 = arith.constant 0 : index
    %c0_5 = arith.constant 0 : index
    %c0_6 = arith.constant 0 : index
    %15 = vector.load %arg5[%c0_4, %c0_5, %c0_6] : memref<2x3x128xf32, #tpu.memory_space<vmem>>, vector<2x3x128xf32>
    %16 = arith.addf %15, %14 : vector<2x3x128xf32>
    %c0_7 = arith.constant 0 : index
    %c0_8 = arith.constant 0 : index
    %c0_9 = arith.constant 0 : index
    %17 = vector.load %arg5[%c0_7, %c0_8, %c0_9] : memref<2x3x128xf32, #tpu.memory_space<vmem>>, vector<2x3x128xf32>
    tpu.vector_store %arg5[%c0_7, %c0_8, %c0_9], %16 {strides = array<i32>} : memref<2x3x128xf32, #tpu.memory_space<vmem>>, vector<2x3x128xf32>,
    %c0_i32_10 = arith.constant 0 : i32
    %18 = arith.cmpi eq, %arg2, %c0_i32_10 : i32
    %19 = arith.extui %18 : i1 to i32
    %c0_i32_11 = arith.constant 0 : i32
    %20 = arith.cmpi ne, %19, %c0_i32_11 : i32
    scf.if %20 {
      %c0_12 = arith.constant 0 : index
      %c0_13 = arith.constant 0 : index
      %c0_14 = arith.constant 0 : index
      %21 = vector.load %arg5[%c0_12, %c0_13, %c0_14] : memref<2x3x128xf32, #tpu.memory_space<vmem>>, vector<2x3x128xf32>
      %cst_15 = arith.constant dense<0.000000e+00> : vector<2x3xf32>
      %22 = vector.multi_reduction <add>, %21, %cst_15 [2] : vector<2x3x128xf32> to vector<2x3xf32>
      %23 = vector.shape_cast %22 : vector<2x3xf32> to vector<1x2x3xf32>
      %c0_16 = arith.constant 0 : index
      %c0_17 = arith.constant 0 : index
      %c0_18 = arith.constant 0 : index
      %24 = vector.load %arg4[%c0_16, %c0_17, %c0_18] : memref<1x2x3xf32, #tpu.memory_space<vmem>>, vector<1x2x3xf32>
      tpu.vector_store %arg4[%c0_16, %c0_17, %c0_18], %23 {strides = array<i32>} : memref<1x2x3xf32, #tpu.memory_space<vmem>>, vector<1x2x3xf32>,
    } else {
    }
    return
  }
  func.func @transform_0(%arg0: i32, %arg1: i32, %arg2: i32) -> (i32, i32, i32) {
    %c1_i32 = arith.constant 1 : i32
    %0 = arith.muli %arg0, %c1_i32 : i32
    %1 = arith.addi %0, %arg2 : i32
    %c1_i32_0 = arith.constant 1 : i32
    %2 = arith.minsi %1, %c1_i32_0 : i32
    %c0_i32 = arith.constant 0 : i32
    %c0_i32_1 = arith.constant 0 : i32
    return %arg1, %c0_i32, %2 : i32, i32, i32
  }
  func.func @transform_1(%arg0: i32, %arg1: i32, %arg2: i32) -> (i32, i32, i32) {
    %c0_i32 = arith.constant 0 : i32
    %c0_i32_0 = arith.constant 0 : i32
    return %arg0, %arg1, %c0_i32 : i32, i32, i32
  }
}

</mosaic_0001>

<llo_original>
// kernel: tpu_custom_call.1
$region0: #{tpu_custom_call.1}
  #allocation0 [shape = 'u32[]', space=smem, size = 0x4, offset = 0x4, fixed_abs, tag = 'smem constant byte address 0x4 - core index']
  #allocation1 [shape = 'u32[144,128]{1,0:T(1,128)}', space=vmem, size = 0x12000, scoped, tag = 'internal scratch']
  #allocation2 [shape = 'f32[2,3,128]{2,1,0:T(4,128)}', space=vmem, size = 0x1000, scoped, tag = 'scratch operand']
  %s0 = inlined_call_operand.hbm [shape: f32[2,4,256], index: 0, kind: input, shape index: {}]
  %s1 = inlined_call_operand.hbm [shape: f32[2,2,3], index: 1, kind: output, shape index: {}]
  %s2 = sld [smem:[#allocation0]]
  $region49: #{tpu_custom_call.1} parent=0
    _
  %s4 = ssub.s32 1, %s2
  %s5 = scalar_select 0, %s4, %s2
  $region1: #{tpu_custom_call.1} parent=0
    #allocation3 [shape = 'u8[8192]{0}', space=vmem, size = 0x2000, scoped, tag = 'input window, operand 0']
    #allocation4 [shape = 's32[2]{0}', space=sflag, size = 0x8, scoped, tag = 'scoped memory for tpu_custom_call.1']
    #allocation5 [shape = 's32[2]{0}', space=sflag, size = 0x8, scoped, tag = 'scoped memory for tpu_custom_call.1']
    #allocation6 [shape = 'u8[2048]{0}', space=vmem, size = 0x800, scoped, tag = 'output window, operand 0']
    %6 = vsyncpa [#allocation4], 0
    %s7 = scalar_lea.sflag [#allocation4], 1
    %8 = vsyncpa %s7, 0
    %9 = vsyncpa [#allocation5], 0
    %s10 = scalar_lea.sflag [#allocation5], 1
    %11 = vsyncpa %s10, 0
    loop: start=0, step=1, limit=4
    $region2: #{tpu_custom_call.1} parent=1 // loop_pre_header
      _
    $region3: #{tpu_custom_call.1} parent=1 // loop_header
      %s13 = sphi 0, %s17
      %p14 = scmp.ge.s32.totalorder %s13, 4
      %s20 = sphi 0, %s39
      %s21 = sphi 0, %s35
      %s22 = sphi 0, %s31
      %s23 = sphi 0, %s20
      %s24 = sphi 0, %s21
      %s25 = sphi 0, %s22
      %s26 = sphi 0, %s23
      %s27 = sphi 0, %s24
      %s28 = sphi 0, %s25
      %s50 = sphi 0, %s52
      %s53 = sphi 0, %s50
      %s54 = sphi 0, %s53
      %s70 = sphi 0, %s54
      %s78 = sphi 0, %s80
      %s81 = sphi 0, %s78
      %s82 = sphi 0, %s81
      %s98 = sphi 0, %s82
    $region4: #{tpu_custom_call.1} parent=1 // loop_header_branch
      %16 = sbr.rel (%p14) target = $region8
    $region5: #{tpu_custom_call.1} parent=1 // loop_body
      %s18 = ssub.s32 %s13, 1
      %s19 = ssub.s32 %s13, 2
      %s29 = sadd.s32 1, %s22
      %p30 = scmp.ge.s32.totalorder %s29, 1
      %s31 = scalar_select %p30, 0, %s29
      %s32 = sadd.s32 1, %s21
      %s33 = scalar_select %p30, %s32, %s21
      %p34 = scmp.ge.s32.totalorder %s33, 1
      %s35 = scalar_select %p34, 0, %s33
      %s36 = sadd.s32 1, %s20
      %s37 = scalar_select %p34, %s36, %s20
      %p38 = scmp.ge.s32.totalorder %s37, 2
      %s39 = scalar_select %p38, 0, %s37
      %s40 = sadd.s32 %s20, %s22
      %p41 = scmp.lt.s32.totalorder %s40, 1
      %s42 = scalar_select %p41, %s40, 1
      %s43 = sadd.s32 %s39, %s31
      %p44 = scmp.lt.s32.totalorder %s43, 1
      %s45 = scalar_select %p44, %s43, 1
      %s46 = ssub.s32 %s21, %s35
      %s47 = ssub.s32 %s42, %s45
      %s48 = sor.u32 %s46, %s47
      %p49 = scmp.eq.s32.totalorder %s48, 0
      %s51 = sadd.s32 %s50, 1
      %s52 = scalar_select %p49, %s50, %s51
      %p55 = pneg %p49
      %p56 = scmp.eq.s32.totalorder %s13, 1
      %p57 = por %p55, %p56
      %p58 = scmp.ne.s32.totalorder %s50, %s53
      %p59 = scmp.eq.s32.totalorder %s13, 0
      %p60 = por %p58, %p59
      %p61 = scmp.ne.s32.totalorder %s50, %s53
      %p62 = scmp.eq.s32.totalorder %s18, 1
      %p63 = por %p61, %p62
      %p64 = scmp.ne.s32.totalorder %s53, %s54
      %p65 = scmp.eq.s32.totalorder %s18, 0
      %p66 = por %p64, %p65
      %p67 = scmp.ne.s32.totalorder %s53, %s54
      %p68 = scmp.eq.s32.totalorder %s19, 1
      %p69 = por %p67, %p68
      %p71 = scmp.ne.s32.totalorder %s54, %s70
      %p72 = scmp.eq.s32.totalorder %s19, 0
      %p73 = por %p71, %p72
      %s74 = ssub.s32 %s20, %s39
      %s75 = ssub.s32 %s21, %s35
      %s76 = sor.u32 %s74, %s75
      %p77 = scmp.eq.s32.totalorder %s76, 0
      %s79 = sadd.s32 %s78, 1
      %s80 = scalar_select %p77, %s78, %s79
      %p83 = pneg %p77
      %p84 = scmp.eq.s32.totalorder %s13, 1
      %p85 = por %p83, %p84
      %p86 = scmp.ne.s32.totalorder %s78, %s81
      %p87 = scmp.eq.s32.totalorder %s13, 0
      %p88 = por %p86, %p87
      %p89 = scmp.ne.s32.totalorder %s78, %s81
      %p90 = scmp.eq.s32.totalorder %s18, 1
      %p91 = por %p89, %p90
      %p92 = scmp.ne.s32.totalorder %s81, %s82
      %p93 = scmp.eq.s32.totalorder %s18, 0
      %p94 = por %p92, %p93
      %p95 = scmp.ne.s32.totalorder %s81, %s82
      %p96 = scmp.eq.s32.totalorder %s19, 1
      %p97 = por %p95, %p96
      %p99 = scmp.ne.s32.totalorder %s82, %s98
      %p100 = scmp.eq.s32.totalorder %s19, 0
      %p101 = por %p99, %p100
      %p102 = scmp.le.s32.totalorder 1, %s13
      %p103 = scmp.lt.s32.totalorder %s13, 3
      %p104 = pnand %p102, %p103
      %p105 = pneg %p104
      // Predicated region
      $region9: #{tpu_custom_call.1} parent=5 // pred_check
        _
      $region10: #{tpu_custom_call.1} parent=5 // pred_check_branch
        %107 = sbr.rel (%p104) target = $region12
      $region11: #{tpu_custom_call.1} parent=5 // pred_region
        %s108 = ssub.s32 %s13, 1
      $region12: #{tpu_custom_call.1} parent=5 // pred_fallthru
        _
      %p109 = scmp.lt.s32.totalorder %s13, 2
      // Predicated region
      $region13: #{tpu_custom_call.1} parent=5 // pred_check
        %p110 = pneg %p109
      $region14: #{tpu_custom_call.1} parent=5 // pred_check_branch
        %112 = sbr.rel (%p110) target = $region16
      $region15: #{tpu_custom_call.1} parent=5 // pred_region
        // Predicated region
        $region17: #{tpu_custom_call.1} parent=15 // pred_check
          %p113 = pneg %p60
        $region18: #{tpu_custom_call.1} parent=15 // pred_check_branch
          %115 = sbr.rel (%p113) target = $region20
        $region19: #{tpu_custom_call.1} parent=15 // pred_region
          %s116 = sand.u32 %s50, 1
          %s117 = scalar_lea.sflag [#allocation4], %s116
          %s118 = sand.u32 %s50, 1
          %s119 = smul.addr %s118, 8
          %s120 = scalar_lea.vmem [#allocation3], %s119
          %s121 = sadd.s32 %s20, %s22
          %p122 = scmp.lt.s32.totalorder %s121, 1
          %s123 = scalar_select %p122, %s121, 1
          %s124 = smul.u32 2, %s21
          %s126 = ssub.s32 128, 128
          %127 = vsyncadd %s117, %s126
          %s128 = smul.addr %s124, 2
          %s129 = sadd.s32 %s123, %s128
          %s130 = smul.addr %s129, 64
          %s131 = scalar_lea.hbm %s0, %s130
          %s132 = sshll.u32 %s120, 4
          %s133 = int_to_ptr.vmem [resolvable:$true] %s132
          %138 = dma.hbm_to_vmem [thread:$0]  %s131, 128, %s133, %s117, 128, 64, 4
        $region20: #{tpu_custom_call.1} parent=15 // pred_fallthru
          _
      $region16: #{tpu_custom_call.1} parent=5 // pred_fallthru
        _
      %p139 = scmp.le.s32.totalorder 1, %s13
      %p140 = scmp.lt.s32.totalorder %s13, 3
      %p141 = pnand %p139, %p140
      %p142 = pneg %p141
      // Predicated region
      $region21: #{tpu_custom_call.1} parent=5 // pred_check
        _
      $region22: #{tpu_custom_call.1} parent=5 // pred_check_branch
        %144 = sbr.rel (%p141) target = $region24
      $region23: #{tpu_custom_call.1} parent=5 // pred_region
        %s145 = ssub.s32 %s13, 1
        %s146 = sand.u32 %s53, 1
        %s147 = scalar_lea.sflag [#allocation4], %s146
        %s148 = sand.u32 %s53, 1
        %s149 = smul.addr %s148, 8
        %s150 = scalar_lea.vmem [#allocation3], %s149
        // Predicated region
        $region25: #{tpu_custom_call.1} parent=23 // pred_check
          %p151 = pneg %p66
        $region26: #{tpu_custom_call.1} parent=23 // pred_check_branch
          %153 = sbr.rel (%p151) target = $region28
        $region27: #{tpu_custom_call.1} parent=23 // pred_region
          %154 = dma.done %s147, 128
        $region28: #{tpu_custom_call.1} parent=23 // pred_fallthru
          _
        %s155 = sand.u32 %s53, 1
        %s156 = scalar_lea.sflag [#allocation4], %s155
        %s157 = sand.u32 %s53, 1
        %s158 = smul.addr %s157, 8
        %s159 = scalar_lea.vmem [#allocation3], %s158
        %p160 = pneg %p66
        %p161 = pneg %p63
        %p162 = pneg %p94
        %p163 = pneg %p91
        %s164 = sand.u32 %s81, 1
        %s165 = scalar_lea.sflag [#allocation5], %s164
        %s166 = sand.u32 %s81, 1
        %s167 = smul.addr %s166, 2
        %s168 = scalar_lea.vmem [#allocation6], %s167
        %s169 = sadd.s32 %s23, %s25
        %p170 = scmp.lt.s32.totalorder %s169, 1
        %s171 = scalar_select %p170, %s169, 1
        %s172 = smul.u32 2, %s24
        %p173 = scmp.eq.s32.totalorder %s25, 0
        // Predicated region
        $region29: #{tpu_custom_call.1} parent=23 // pred_check
          %p174 = pneg %p173
        $region30: #{tpu_custom_call.1} parent=23 // pred_check_branch
          %176 = sbr.rel (%p174) target = $region32
        $region31: #{tpu_custom_call.1} parent=23 // pred_region
          %177 = vst [vmem:[#allocation2] sm:$0x7] 0.0
          %178 = vst [vmem:[#allocation2 + $0x4] sm:$0x7] 0.0
        $region32: #{tpu_custom_call.1} parent=23 // pred_fallthru
          _
        %v179 = vld [vmem:[%s150] sm:$0xf]
        %v180 = vld [vmem:[%s150 + $0x4] sm:$0xf]
        %vm181 = vcmp.gt.f32.partialorder %v179, 20.0
        %vm182 = vcmp.gt.f32.partialorder %v180, 20.0
        %v183 = vmin.f32 %v179, 20.0
        %v184 = vmin.f32 %v180, 20.0
        %v185 = vmul.f32 %v183, 1.442695
        %v186 = vpow.pop %v185
        %v187 = vmul.f32 %v184, 1.442695
        %v188 = vpow.pop %v187
        %v189 = vadd.f32 %v186, 1.0
        %v190 = vlog2.pop %v189
        %v191 = vmul.f32 %v190, 0.6931472
        %v192 = vmul.f32 -0.5, %v186
        %v193 = vadd.f32 %v192, 1.0
        %v194 = vmul.f32 %v193, %v186
        %v195 = vand.u32 2147483647, %v186
        %vm196 = vcmp.lt.f32.partialorder %v195, 0.0004427343
        %v197 = vsel %vm196, %v194, %v191
        %v198 = vadd.f32 %v188, 1.0
        %v199 = vlog2.pop %v198
        %v200 = vmul.f32 %v199, 0.6931472
        %v201 = vmul.f32 -0.5, %v188
        %v202 = vadd.f32 %v201, 1.0
        %v203 = vmul.f32 %v202, %v188
        %v204 = vand.u32 2147483647, %v188
        %vm205 = vcmp.lt.f32.partialorder %v204, 0.0004427343
        %v206 = vsel %vm205, %v203, %v200
        %v207 = vsel %vm181, %v179, %v197
        %v208 = vsel %vm182, %v180, %v206
        %v209 = vlaneseq
        %v210 = vshrl.u32 %v209, 7
        %v211 = vsub.s32 3, %v210
        %v212 = vrot.slane %v207, %v211
        %v213 = vlaneseq
        %v214 = vshrl.u32 %v213, 7
        %v215 = vsub.s32 3, %v214
        %v216 = vrot.slane %v208, %v215
        %v217 = vmul.f32 %v179, %v212
        %v218 = vmul.f32 %v180, %v216
        %v219 = vld [vmem:[#allocation2] sm:$0x7]
        %v220 = vld [vmem:[#allocation2 + $0x4] sm:$0x7]
        %v221 = vadd.f32 %v219, %v217
        %v222 = vadd.f32 %v220, %v218
        %223 = vst [vmem:[#allocation2] sm:$0x7] %v221
        %224 = vst [vmem:[#allocation2 + $0x4] sm:$0x7] %v222
        // Predicated region
        $region33: #{tpu_custom_call.1} parent=23 // pred_check
          %p225 = pneg %p173
        $region34: #{tpu_custom_call.1} parent=23 // pred_check_branch
          %227 = sbr.rel (%p225) target = $region36
        $region35: #{tpu_custom_call.1} parent=23 // pred_region
          %v228 = vld [vmem:[#allocation2] sm:$0x7]
          %v229 = vld [vmem:[#allocation2 + $0x4] sm:$0x7]
          %vm230 = vcmask 1042432
          %v231 = vsel %vm230, %v228, 0.0
          %232 = vadd.xlane.f32.xlu0 %v231
          %v233 = vpop.xlane.xlu0 %232
          %v234 = vsel %vm230, %v229, 0.0
          %235 = vadd.xlane.f32.xlu0 %v234
          %v236 = vpop.xlane.xlu0 %235
          %v239 = vlaneseq
          %v240 = vand.u32 %v239, 127
          %v241 = vlaneseq
          %v242 = vshrl.u32 %v241, 7
          %v243 = vsub.s32 %v240, %v242
          %v244 = vrot.slane %v233, %v243
          %v245 = vlaneseq
          %v246 = vshrl.u32 %v245, 7
          %v247 = vsub.s32 %v240, %v246
          %v248 = vrot.slane %v236, %v247
          %vm249 = vcmask 1041409
          %v250 = vsel %vm249, %v248, %v244
          %vm252 = vcmask 17408
          %253 = vst.msk [vmem:[%s168] sm:$0x3] %vm252, %v250
        $region36: #{tpu_custom_call.1} parent=23 // pred_fallthru
          _
        %s254 = sand.u32 %s81, 1
        %s255 = scalar_lea.sflag [#allocation5], %s254
        %s256 = sand.u32 %s81, 1
        %s257 = smul.addr %s256, 2
        %s258 = scalar_lea.vmem [#allocation6], %s257
        // Predicated region
        $region37: #{tpu_custom_call.1} parent=23 // pred_check
          %p259 = pneg %p91
        $region38: #{tpu_custom_call.1} parent=23 // pred_check_branch
          %261 = sbr.rel (%p259) target = $region40
        $region39: #{tpu_custom_call.1} parent=23 // pred_region
          %s263 = ssub.s32 32, 32
          %264 = vsyncadd %s255, %s263
          %s265 = sadd.s32 %s24, %s23
          %s266 = smul.addr %s265, 32
          %s267 = scalar_lea.hbm %s1, %s266
          %s269 = sshll.u32 %s258, 4
          %s270 = int_to_ptr.vmem [resolvable:$true] %s269
          %272 = dma.vmem_to_hbm [thread:$0]  %s270, 32, %s267, %s255
        $region40: #{tpu_custom_call.1} parent=23 // pred_fallthru
          _
      $region24: #{tpu_custom_call.1} parent=5 // pred_fallthru
        _
      %p273 = scmp.le.s32.totalorder 2, %s13
      // Predicated region
      $region41: #{tpu_custom_call.1} parent=5 // pred_check
        %p274 = pneg %p273
      $region42: #{tpu_custom_call.1} parent=5 // pred_check_branch
        %276 = sbr.rel (%p274) target = $region44
      $region43: #{tpu_custom_call.1} parent=5 // pred_region
        %s277 = ssub.s32 %s13, 2
        // Predicated region
        $region45: #{tpu_custom_call.1} parent=43 // pred_check
          %p278 = pneg %p97
        $region46: #{tpu_custom_call.1} parent=43 // pred_check_branch
          %280 = sbr.rel (%p278) target = $region48
        $region47: #{tpu_custom_call.1} parent=43 // pred_region
          %s281 = sand.u32 %s82, 1
          %s282 = scalar_lea.sflag [#allocation5], %s281
          %s283 = sand.u32 %s82, 1
          %s284 = smul.addr %s283, 2
          %s285 = scalar_lea.vmem [#allocation6], %s284
          %286 = dma.done %s282, 32
        $region48: #{tpu_custom_call.1} parent=43 // pred_fallthru
          _
      $region44: #{tpu_custom_call.1} parent=5 // pred_fallthru
        _
    $region6: #{tpu_custom_call.1} parent=1 // loop_footer
      %s17 = sadd.s32 1, %s13
    $region7: #{tpu_custom_call.1} parent=1 // loop_footer_branch
      %12 = sbr.rel target = $region3
    $region8: #{tpu_custom_call.1} parent=1 // loop_exit
      _
    %287 = vsyncpa [#allocation4], 1
    %s288 = scalar_lea.sflag [#allocation4], 1
    %289 = vsyncpa %s288, 1
    %290 = vsyncpa [#allocation5], 1
    %s291 = scalar_lea.sflag [#allocation5], 1
    %292 = vsyncpa %s291, 1

</llo_original>
